<compile_context>
chip_gen: v7x
topology: tpu7x:2x2x1
jax: 0.10.0
libtpu: 0.0.40
codegen_flags: <defaults>
</compile_context>

<pallas_src>
import functools

import jax
import jax.numpy as jnp
from jax import lax
from jax.experimental import pallas as pl
from jax.experimental.pallas import tpu as pltpu


def _csd_kernel(x_ref, m_ref, p_ref, out_ref, *,
                n_features, n_frequencies, seq_len):
    F = n_features
    Q = n_frequencies
    T = seq_len

    # x_ref block: (F, T, B_BLK), batch on lanes.
    # s[t, b] = sum_i x[b, t, i]   -- F-1 lane-dense VPU adds, no XLU.
    S = x_ref[0].astype(jnp.float32)                       # (T, B_BLK)
    for i in range(1, F):
        S = S + x_ref[i].astype(jnp.float32)

    # Bilinear form with the fused pad/DFT/mean table:
    #   out[r, b] = sum_{a,k} M[r, a, k] * S[a, b] * S[k, b]
    # step 1: tmp[r*T + a, b] = sum_k M[r, a, k] * S[k, b]      (MXU)
    tmp = jnp.dot(m_ref[...], S, preferred_element_type=jnp.float32)  # (2Q*T, B)
    # step 2: elementwise multiply by S replicated over the 2Q groups,
    #         then block-sum over a with a 0/1 matrix              (MXU)
    stile = jnp.concatenate([S] * (2 * Q), axis=0)                    # (2Q*T, B)
    out_ref[...] = jnp.dot(p_ref[...], tmp * stile,
                           preferred_element_type=jnp.float32)        # (2Q, B)


def cross_spectral_density(x, n_frequencies, time_axis=1, *, batch_block=128):
    """Pallas implementation of CrossSpectralDensity.forward (complex64 out)."""
    assert time_axis == 1, "kernel implements rfft over the time axis (dim 1)"
    B, T, Fdim = x.shape
    Q = n_frequencies
    assert Q <= T // 2 + 1, "n_frequencies must be <= T//2 + 1"

    # --- host-side tables -------------------------------------------------
    # M[q, a, k] = scale * exp(-i * 2*pi*q*(a - k + pad_l)/T) masked to the
    # lags kept by conv1d(padding='same'); scale = 1/(F^2 * sqrt(T)) folds in
    # the ortho norm and the mean over the F^2 feature pairs.
    pad_l = (T - 1) // 2
    scale = 1.0 / (float(Fdim * Fdim) * (float(T) ** 0.5))
    a_idx = jnp.arange(T, dtype=jnp.float32)[:, None]          # (T, 1)
    k_idx = jnp.arange(T, dtype=jnp.float32)[None, :]          # (1, T)
    shift = a_idx - k_idx + float(pad_l)                       # (T, T)
    valid = (shift >= 0.0) & (shift <= float(T - 1))           # same-padding mask
    q_idx = jnp.arange(Q, dtype=jnp.float32)[:, None, None]    # (Q, 1, 1)
    theta = (2.0 * jnp.pi / float(T)) * q_idx * shift[None]    # (Q, T, T)
    m_re = jnp.where(valid[None], jnp.cos(theta) * scale, 0.0)
    m_im = jnp.where(valid[None], -jnp.sin(theta) * scale, 0.0)
    m_tbl = jnp.concatenate([m_re, m_im], axis=0).reshape(2 * Q * T, T)
    m_tbl = m_tbl.astype(jnp.float32)                          # (2Q*T, T)

    # Block-sum matrix: p[r, r*T + a] = 1  -> group-sum over a on the MXU.
    p_tbl = (jnp.arange(2 * Q * T)[None, :] // T
             == jnp.arange(2 * Q)[:, None]).astype(jnp.float32)  # (2Q, 2Q*T)

    # --- batch-on-lanes layout & padding ----------------------------------
    B_BLK = batch_block
    n_blocks = (B + B_BLK - 1) // B_BLK
    B_pad = n_blocks * B_BLK
    xt = jnp.transpose(x, (2, 1, 0)).astype(jnp.float32)       # (F, T, B)
    if B_pad != B:
        xt = jnp.pad(xt, ((0, 0), (0, 0), (0, B_pad - B)))     # zero batches -> zero out

    kernel = functools.partial(_csd_kernel, n_features=Fdim,
                               n_frequencies=Q, seq_len=T)
    out = pl.pallas_call(
        kernel,
        out_shape=jax.ShapeDtypeStruct((2 * Q, B_pad), jnp.float32),
        grid_spec=pltpu.PrefetchScalarGridSpec(
            num_scalar_prefetch=0,
            grid=(n_blocks,),
            in_specs=[
                pl.BlockSpec((Fdim, T, B_BLK), lambda b: (0, 0, b)),
                pl.BlockSpec((2 * Q * T, T), lambda b: (0, 0)),
                pl.BlockSpec((2 * Q, 2 * Q * T), lambda b: (0, 0)),
            ],
            out_specs=pl.BlockSpec((2 * Q, B_BLK), lambda b: (0, b)),
        ),
        compiler_params=pltpu.CompilerParams(
            dimension_semantics=("parallel",),
            vmem_limit_bytes=16 * 1024 * 1024,
        ),
    )(xt, m_tbl, p_tbl)

    # Wrapper-side layout plumbing: drop batch padding, split re/im,
    # reshape to (B, Q, 1) and combine to complex64 (no complex dtype in-kernel).
    out = out[:, :B]                                           # (2Q, B)
    out_re = jnp.transpose(out[:Q])[..., None]                 # (B, Q, 1)
    out_im = jnp.transpose(out[Q:])[..., None]                 # (B, Q, 1)
    return lax.complex(out_re, out_im)


def _csd_reference(x, n_frequencies):
    """Pure-JAX reference reproducing the PyTorch forward semantics."""
    B, T, Fdim = x.shape
    pad_l = (T - 1) // 2
    pad_r = (T - 1) - pad_l
    xpad = jnp.pad(x, ((0, 0), (pad_l, pad_r), (0, 0)))
    convs = []
    for i in range(Fdim):
        for j in range(Fdim):
            win = jnp.stack([xpad[:, t:t + T, i] for t in range(T)], axis=1)  # (B,T,T)
            xc = jnp.einsum('btk,bk->bt', win, x[:, :, j])                    # (B,T)
            convs.append(xc[..., None])
    convs = jnp.concatenate(convs, axis=-1)                                   # (B,T,F*F)
    fft = jnp.fft.rfft(convs, axis=1, norm='ortho')[:, :n_frequencies, :]
    return jnp.mean(fft, axis=-1, keepdims=True)


if __name__ == "__main__":
    B, T, Fdim = 2, 16, 4          # batch=2, seq(time)=16, n_features=4
    n_frequencies = 5              # <= T//2 + 1 = 9
    key = jax.random.PRNGKey(0)
    x = jax.random.normal(key, (B, T, Fdim), dtype=jnp.float32)

    out = cross_spectral_density(x, n_frequencies, time_axis=1)
    out = jax.block_until_ready(out)

    assert out.shape == (B, n_frequencies, 1), out.shape
    assert out.dtype == jnp.complex64, out.dtype

    ref = _csd_reference(x, n_frequencies)
    if not bool(jnp.allclose(out, ref, atol=2e-4, rtol=2e-4)):
        raise AssertionError("Pallas kernel output does not match JAX reference")

    print("KERNEL_OK")
</pallas_src>

<mosaic_0001>
module attributes {stable_mosaic.version = 11 : i64} {
  func.func @_csd_kernel(%arg0: i32, %arg1: memref<4x16x128xf32, #tpu.memory_space<vmem>>, %arg2: memref<160x16xf32, #tpu.memory_space<vmem>>, %arg3: memref<10x160xf32, #tpu.memory_space<vmem>>, %arg4: memref<10x128xf32, #tpu.memory_space<vmem>>) attributes {dimension_semantics = [#tpu.dimension_semantics<parallel>], iteration_bounds = array<i64: 1>, scalar_prefetch = 0 : i64, scratch_operands = 0 : i64, tpu.core_type = #tpu.core_type<tc>, window_params = [{transform_indices = @transform_0, window_bounds = array<i64: 4, 16, 128>}, {pipeline_mode = #tpu.pipeline_mode<synchronous>, transform_indices = @transform_1, window_bounds = array<i64: 160, 16>}, {pipeline_mode = #tpu.pipeline_mode<synchronous>, transform_indices = @transform_2, window_bounds = array<i64: 10, 160>}, {transform_indices = @transform_3, window_bounds = array<i64: 10, 128>}]} {
    %c0 = arith.constant 0 : index
    %c0_0 = arith.constant 0 : index
    %c0_1 = arith.constant 0 : index
    %0 = vector.load %arg1[%c0, %c0_0, %c0_1] : memref<4x16x128xf32, #tpu.memory_space<vmem>>, vector<1x16x128xf32>
    %1 = vector.shape_cast %0 : vector<1x16x128xf32> to vector<16x128xf32>
    %c1 = arith.constant 1 : index
    %c0_2 = arith.constant 0 : index
    %c0_3 = arith.constant 0 : index
    %2 = vector.load %arg1[%c1, %c0_2, %c0_3] : memref<4x16x128xf32, #tpu.memory_space<vmem>>, vector<1x16x128xf32>
    %3 = vector.shape_cast %2 : vector<1x16x128xf32> to vector<16x128xf32>
    %4 = arith.addf %1, %3 : vector<16x128xf32>
    %c2 = arith.constant 2 : index
    %c0_4 = arith.constant 0 : index
    %c0_5 = arith.constant 0 : index
    %5 = vector.load %arg1[%c2, %c0_4, %c0_5] : memref<4x16x128xf32, #tpu.memory_space<vmem>>, vector<1x16x128xf32>
    %6 = vector.shape_cast %5 : vector<1x16x128xf32> to vector<16x128xf32>
    %7 = arith.addf %4, %6 : vector<16x128xf32>
    %c3 = arith.constant 3 : index
    %c0_6 = arith.constant 0 : index
    %c0_7 = arith.constant 0 : index
    %8 = vector.load %arg1[%c3, %c0_6, %c0_7] : memref<4x16x128xf32, #tpu.memory_space<vmem>>, vector<1x16x128xf32>
    %9 = vector.shape_cast %8 : vector<1x16x128xf32> to vector<16x128xf32>
    %10 = arith.addf %7, %9 : vector<16x128xf32>
    %c0_8 = arith.constant 0 : index
    %c0_9 = arith.constant 0 : index
    %11 = vector.load %arg2[%c0_8, %c0_9] : memref<160x16xf32, #tpu.memory_space<vmem>>, vector<160x16xf32>
    %cst = arith.constant dense<0.000000e+00> : vector<160x128xf32>
    %12 = tpu.matmul %11, %10, %cst {dimension_numbers = #tpu.dot_dimension_numbers<[1], [0], [0], [1], [0, 0, 1, 1], [], []>} : vector<160x16xf32>, vector<16x128xf32>, vector<160x128xf32> -> vector<160x128xf32>
    %13 = tpu.concatenate %10, %10, %10, %10, %10, %10, %10, %10, %10, %10 in 0 : vector<16x128xf32>, vector<16x128xf32>, vector<16x128xf32>, vector<16x128xf32>, vector<16x128xf32>, vector<16x128xf32>, vector<16x128xf32>, vector<16x128xf32>, vector<16x128xf32>, vector<16x128xf32> -> vector<160x128xf32>
    %c0_10 = arith.constant 0 : index
    %c0_11 = arith.constant 0 : index
    %14 = vector.load %arg3[%c0_10, %c0_11] : memref<10x160xf32, #tpu.memory_space<vmem>>, vector<10x160xf32>
    %15 = arith.mulf %12, %13 : vector<160x128xf32>
    %cst_12 = arith.constant dense<0.000000e+00> : vector<10x128xf32>
    %16 = tpu.matmul %14, %15, %cst_12 {dimension_numbers = #tpu.dot_dimension_numbers<[1], [0], [0], [1], [0, 0, 1, 1], [], []>} : vector<10x160xf32>, vector<160x128xf32>, vector<10x128xf32> -> vector<10x128xf32>
    %c0_13 = arith.constant 0 : index
    %c0_14 = arith.constant 0 : index
    %17 = vector.load %arg4[%c0_13, %c0_14] : memref<10x128xf32, #tpu.memory_space<vmem>>, vector<10x128xf32>
    tpu.vector_store %arg4[%c0_13, %c0_14], %16 {strides = array<i32>} : memref<10x128xf32, #tpu.memory_space<vmem>>, vector<10x128xf32>,
    return
  }
  func.func @transform_0(%arg0: i32) -> (i32, i32, i32) {
    %c0_i32 = arith.constant 0 : i32
    %c0_i32_0 = arith.constant 0 : i32
    %c0_i32_1 = arith.constant 0 : i32
    return %c0_i32, %c0_i32_0, %arg0 : i32, i32, i32
  }
  func.func @transform_1(%arg0: i32) -> (i32, i32) {
    %c0_i32 = arith.constant 0 : i32
    %c0_i32_0 = arith.constant 0 : i32
    %c0_i32_1 = arith.constant 0 : i32
    return %c0_i32, %c0_i32_0 : i32, i32
  }
  func.func @transform_2(%arg0: i32) -> (i32, i32) {
    %c0_i32 = arith.constant 0 : i32
    %c0_i32_0 = arith.constant 0 : i32
    %c0_i32_1 = arith.constant 0 : i32
    return %c0_i32, %c0_i32_0 : i32, i32
  }
  func.func @transform_3(%arg0: i32) -> (i32, i32) {
    %c0_i32 = arith.constant 0 : i32
    %c0_i32_0 = arith.constant 0 : i32
    return %c0_i32, %arg0 : i32, i32
  }
}

</mosaic_0001>

<llo_original>
// kernel: tpu_custom_call.1
$region0: #{tpu_custom_call.1}
  #allocation0 [shape = 'u32[]', space=smem, size = 0x4, offset = 0x4, fixed_abs, tag = 'smem constant byte address 0x4 - core index']
  #allocation1 [shape = 'u32[144,128]{1,0:T(1,128)}', space=vmem, size = 0x12000, scoped, tag = 'internal scratch']
  %s0 = inlined_call_operand.vmem [shape: f32[4,16,128], index: 0, kind: input, shape index: {}]
  %s1 = inlined_call_operand.vmem [shape: f32[160,16], index: 1, kind: input, shape index: {}]
  %s2 = inlined_call_operand.vmem [shape: f32[10,160], index: 2, kind: input, shape index: {}]
  %s3 = inlined_call_operand.hbm [shape: f32[10,128], index: 3, kind: output, shape index: {}]
  %s4 = sld [smem:[#allocation0]]
  $region22: #{tpu_custom_call.1} parent=0
    _
  %s6 = ssub.s32 1, %s4
  %s7 = scalar_select 0, %s6, %s4
  $region1: #{tpu_custom_call.1} parent=0
    #allocation2 [shape = 'u8[8192]{0}', space=vmem, size = 0x2000, scoped, tag = 'output window, operand 0, single buffered']
    #allocation3 [shape = 's32[1]{0}', space=sflag, size = 0x4, scoped, tag = 'scoped memory for tpu_custom_call.1']
    %8 = vsyncpa [#allocation3], 0
    // Predicated region
    $region2: #{tpu_custom_call.1} parent=1 // pred_check
      _
    $region3: #{tpu_custom_call.1} parent=1 // pred_check_branch
      %10 = sbr.rel (0) target = $region5
    $region4: #{tpu_custom_call.1} parent=1 // pred_region
      _
    $region5: #{tpu_custom_call.1} parent=1 // pred_fallthru
      _
    // Predicated region
    $region6: #{tpu_custom_call.1} parent=1 // pred_check
      _
    $region7: #{tpu_custom_call.1} parent=1 // pred_check_branch
      %12 = sbr.rel (0) target = $region9
    $region8: #{tpu_custom_call.1} parent=1 // pred_region
      _
    $region9: #{tpu_custom_call.1} parent=1 // pred_fallthru
      _
    // Predicated region
    $region10: #{tpu_custom_call.1} parent=1 // pred_check
      _
    $region11: #{tpu_custom_call.1} parent=1 // pred_check_branch
      %14 = sbr.rel (0) target = $region13
    $region12: #{tpu_custom_call.1} parent=1 // pred_region
      _
    $region13: #{tpu_custom_call.1} parent=1 // pred_fallthru
      _
    %v15 = vld [vmem:[%s0] sm:$0xff]
    %v16 = vld [vmem:[%s0 + $0x8] sm:$0xff]
    %s17 = scalar_lea.vmem %s0, 16
    %v18 = vld [vmem:[%s17] sm:$0xff]
    %v19 = vld [vmem:[%s17 + $0x8] sm:$0xff]
    %v20 = vadd.f32 %v15, %v18
    %v21 = vadd.f32 %v16, %v19
    %s22 = scalar_lea.vmem %s0, 32
    %v23 = vld [vmem:[%s22] sm:$0xff]
    %v24 = vld [vmem:[%s22 + $0x8] sm:$0xff]
    %v25 = vadd.f32 %v20, %v23
    %v26 = vadd.f32 %v21, %v24
    %s27 = scalar_lea.vmem %s0, 48
    %v28 = vld [vmem:[%s27] sm:$0xff]
    %v29 = vld [vmem:[%s27 + $0x8] sm:$0xff]
    %v30 = vadd.f32 %v25, %v28
    %v31 = vadd.f32 %v26, %v29
    %v32 = vld [vmem:[%s1] sm:$0xff]
    %v33 = vld [vmem:[%s1 + $0x8] sm:$0xff]
    %v34 = vld [vmem:[%s1 + $0x10] sm:$0xff]
    %v35 = vld [vmem:[%s1 + $0x18] sm:$0xff]
    %v36 = vld [vmem:[%s1 + $0x20] sm:$0xff]
    %v37 = vld [vmem:[%s1 + $0x28] sm:$0xff]
    %v38 = vld [vmem:[%s1 + $0x30] sm:$0xff]
    %v39 = vld [vmem:[%s1 + $0x38] sm:$0xff]
    %v40 = vld [vmem:[%s1 + $0x40] sm:$0xff]
    %v41 = vld [vmem:[%s1 + $0x48] sm:$0xff]
    %v42 = vld [vmem:[%s1 + $0x50] sm:$0xff]
    %v43 = vld [vmem:[%s1 + $0x58] sm:$0xff]
    %v44 = vld [vmem:[%s1 + $0x60] sm:$0xff]
    %v45 = vld [vmem:[%s1 + $0x68] sm:$0xff]
    %v46 = vld [vmem:[%s1 + $0x70] sm:$0xff]
    %v47 = vld [vmem:[%s1 + $0x78] sm:$0xff]
    %v48 = vld [vmem:[%s1 + $0x80] sm:$0xff]
    %v49 = vld [vmem:[%s1 + $0x88] sm:$0xff]
    %v50 = vld [vmem:[%s1 + $0x90] sm:$0xff]
    %v51 = vld [vmem:[%s1 + $0x98] sm:$0xff]
    %vm52 = vcmask 130048
    %v54 = vsel %vm52, %v32, 0
    %v57 = vsel %vm52, %v33, 0
    %v60 = vsel %vm52, %v34, 0
    %v63 = vsel %vm52, %v35, 0
    %v66 = vsel %vm52, %v36, 0
    %v69 = vsel %vm52, %v37, 0
    %v72 = vsel %vm52, %v38, 0
    %v75 = vsel %vm52, %v39, 0
    %v78 = vsel %vm52, %v40, 0
    %v81 = vsel %vm52, %v41, 0
    %v84 = vsel %vm52, %v42, 0
    %v87 = vsel %vm52, %v43, 0
    %v90 = vsel %vm52, %v44, 0
    %v93 = vsel %vm52, %v45, 0
    %v96 = vsel %vm52, %v46, 0
    %v99 = vsel %vm52, %v47, 0
    %v102 = vsel %vm52, %v48, 0
    %v105 = vsel %vm52, %v49, 0
    %v108 = vsel %vm52, %v50, 0
    %v111 = vsel %vm52, %v51, 0
    %113 = vmatprep.subr.mxu0 0.0
    %114 = vmatpush1.msra.mxu0 %v30
    %115 = vmatprep.subr.mxu0 0.0
    %116 = vmatpush1.msra.mxu0 %v31
    %117 = vmatprep.subr.mxu0 0.0
    %118 = vmatpush1.msra.mxu0 0.0
    %119 = vmatprep.subr.mxu0 0.0
    %120 = vmatpush1.msra.mxu0 0.0
    %121 = vmatprep.subr.mxu0 0.0
    %122 = vmatpush1.msra.mxu0 0.0
    %123 = vmatprep.subr.mxu0 0.0
    %124 = vmatpush1.msra.mxu0 0.0
    %125 = vmatprep.subr.mxu0 0.0
    %126 = vmatpush1.msra.mxu0 0.0
    %127 = vmatprep.subr.mxu0 0.0
    %128 = vmatpush1.msra.mxu0 0.0
    %129 = vmatprep.subr.mxu0 0.0
    %130 = vmatpush1.msra.mxu0 0.0
    %131 = vmatprep.subr.mxu0 0.0
    %132 = vmatpush1.msra.mxu0 0.0
    %133 = vmatprep.subr.mxu0 0.0
    %134 = vmatpush1.msra.mxu0 0.0
    %135 = vmatprep.subr.mxu0 0.0
    %136 = vmatpush1.msra.mxu0 0.0
    %137 = vmatprep.subr.mxu0 0.0
    %138 = vmatpush1.msra.mxu0 0.0
    %139 = vmatprep.subr.mxu0 0.0
    %140 = vmatpush1.msra.mxu0 0.0
    %141 = vmatprep.subr.mxu0 0.0
    %142 = vmatpush1.msra.mxu0 0.0
    %143 = vmatprep.subr.mxu0 0.0
    %144 = vmatpush1.msra.mxu0 0.0
    %145 = vmatprep.subr.mxu0 0.0
    %146 = vmatpush1.msra.mxu0 0.0
    %147 = vmatprep.subr.mxu0 0.0
    %148 = vmatpush1.msra.mxu0 0.0
    %149 = vmatprep.subr.mxu0 0.0
    %150 = vmatpush1.msra.mxu0 0.0
    %151 = vmatprep.subr.mxu0 0.0
    %152 = vmatpush1.msra.mxu0 0.0
    %153 = vmatprep.subr.mxu0 0.0
    %154 = vmatpush1.msra.mxu0 0.0
    %155 = vmatprep.subr.mxu0 0.0
    %156 = vmatpush1.msra.mxu0 0.0
    %157 = vmatprep.subr.mxu0 0.0
    %158 = vmatpush1.msra.mxu0 0.0
    %159 = vmatprep.subr.mxu0 0.0
    %160 = vmatpush1.msra.mxu0 0.0
    %161 = vmatprep.subr.mxu0 0.0
    %162 = vmatpush1.msra.mxu0 0.0
    %163 = vmatprep.subr.mxu0 0.0
    %164 = vmatpush1.msra.mxu0 0.0
    %165 = vmatprep.subr.mxu0 0.0
    %166 = vmatpush1.msra.mxu0 0.0
    %167 = vmatprep.subr.mxu0 0.0
    %168 = vmatpush1.msra.mxu0 0.0
    %169 = vmatprep.subr.mxu0 0.0
    %170 = vmatpush1.msra.mxu0 0.0
    %171 = vmatprep.subr.mxu0 0.0
    %172 = vmatpush1.msra.mxu0 0.0
    %173 = vmatprep.subr.mxu0 0.0
    %174 = vmatpush1.msra.mxu0 0.0
    %175 = vmatprep.subr.mxu0 0.0
    %176 = vmatpush1.msra.mxu0 0.0
    %177 = vmatprep.mubr.f32.mxu0 0.0
    %178 = vmatmul.mubr.f32.gmra.mrb[0].mxu0 %v54
    %v179 = vpop.f32.mrb[0].mxu0
    %v180 = vadd.f32 0.0, %v179
    %v181 = vpop.f32.mrb[0].mxu0
    %182 = vmatprep.mubr.f32.mxu0 0.0
    %183 = vmatmul.mubr.f32.gmra.mrb[0].mxu0 %v57
    %v184 = vpop.f32.mrb[0].mxu0
    %v185 = vadd.f32 0.0, %v184
    %v186 = vpop.f32.mrb[0].mxu0
    %187 = vmatprep.mubr.f32.mxu0 0.0
    %188 = vmatmul.mubr.f32.gmra.mrb[0].mxu0 %v60
    %v189 = vpop.f32.mrb[0].mxu0
    %v190 = vadd.f32 0.0, %v189
    %v191 = vpop.f32.mrb[0].mxu0
    %192 = vmatprep.mubr.f32.mxu0 0.0
    %193 = vmatmul.mubr.f32.gmra.mrb[0].mxu0 %v63
    %v194 = vpop.f32.mrb[0].mxu0
    %v195 = vadd.f32 0.0, %v194
    %v196 = vpop.f32.mrb[0].mxu0
    %197 = vmatprep.mubr.f32.mxu0 0.0
    %198 = vmatmul.mubr.f32.gmra.mrb[0].mxu0 %v66
    %v199 = vpop.f32.mrb[0].mxu0
    %v200 = vadd.f32 0.0, %v199
    %v201 = vpop.f32.mrb[0].mxu0
    %202 = vmatprep.mubr.f32.mxu0 0.0
    %203 = vmatmul.mubr.f32.gmra.mrb[0].mxu0 %v69
    %v204 = vpop.f32.mrb[0].mxu0
    %v205 = vadd.f32 0.0, %v204
    %v206 = vpop.f32.mrb[0].mxu0
    %207 = vmatprep.mubr.f32.mxu0 0.0
    %208 = vmatmul.mubr.f32.gmra.mrb[0].mxu0 %v72
    %v209 = vpop.f32.mrb[0].mxu0
    %v210 = vadd.f32 0.0, %v209
    %v211 = vpop.f32.mrb[0].mxu0
    %212 = vmatprep.mubr.f32.mxu0 0.0
    %213 = vmatmul.mubr.f32.gmra.mrb[0].mxu0 %v75
    %v214 = vpop.f32.mrb[0].mxu0
    %v215 = vadd.f32 0.0, %v214
    %v216 = vpop.f32.mrb[0].mxu0
    %217 = vmatprep.mubr.f32.mxu0 0.0
    %218 = vmatmul.mubr.f32.gmra.mrb[0].mxu0 %v78
    %v219 = vpop.f32.mrb[0].mxu0
    %v220 = vadd.f32 0.0, %v219
    %v221 = vpop.f32.mrb[0].mxu0
    %222 = vmatprep.mubr.f32.mxu0 0.0
    %223 = vmatmul.mubr.f32.gmra.mrb[0].mxu0 %v81
    %v224 = vpop.f32.mrb[0].mxu0
    %v225 = vadd.f32 0.0, %v224
    %v226 = vpop.f32.mrb[0].mxu0
    %227 = vmatprep.mubr.f32.mxu0 0.0
    %228 = vmatmul.mubr.f32.gmra.mrb[0].mxu0 %v84
    %v229 = vpop.f32.mrb[0].mxu0
    %v230 = vadd.f32 0.0, %v229
    %v231 = vpop.f32.mrb[0].mxu0
    %232 = vmatprep.mubr.f32.mxu0 0.0
    %233 = vmatmul.mubr.f32.gmra.mrb[0].mxu0 %v87
    %v234 = vpop.f32.mrb[0].mxu0
    %v235 = vadd.f32 0.0, %v234
    %v236 = vpop.f32.mrb[0].mxu0
    %237 = vmatprep.mubr.f32.mxu0 0.0
    %238 = vmatmul.mubr.f32.gmra.mrb[0].mxu0 %v90
    %v239 = vpop.f32.mrb[0].mxu0
    %v240 = vadd.f32 0.0, %v239
    %v241 = vpop.f32.mrb[0].mxu0
    %242 = vmatprep.mubr.f32.mxu0 0.0
    %243 = vmatmul.mubr.f32.gmra.mrb[0].mxu0 %v93
    %v244 = vpop.f32.mrb[0].mxu0
    %v245 = vadd.f32 0.0, %v244
    %v246 = vpop.f32.mrb[0].mxu0
    %247 = vmatprep.mubr.f32.mxu0 0.0
    %248 = vmatmul.mubr.f32.gmra.mrb[0].mxu0 %v96
    %v249 = vpop.f32.mrb[0].mxu0
    %v250 = vadd.f32 0.0, %v249
    %v251 = vpop.f32.mrb[0].mxu0
    %252 = vmatprep.mubr.f32.mxu0 0.0
    %253 = vmatmul.mubr.f32.gmra.mrb[0].mxu0 %v99
    %v254 = vpop.f32.mrb[0].mxu0
    %v255 = vadd.f32 0.0, %v254
    %v256 = vpop.f32.mrb[0].mxu0
    %257 = vmatprep.mubr.f32.mxu0 0.0
    %258 = vmatmul.mubr.f32.gmra.mrb[0].mxu0 %v102
    %v259 = vpop.f32.mrb[0].mxu0
    %v260 = vadd.f32 0.0, %v259
    %v261 = vpop.f32.mrb[0].mxu0
    %262 = vmatprep.mubr.f32.mxu0 0.0
    %263 = vmatmul.mubr.f32.gmra.mrb[0].mxu0 %v105
    %v264 = vpop.f32.mrb[0].mxu0
    %v265 = vadd.f32 0.0, %v264
    %v266 = vpop.f32.mrb[0].mxu0
    %267 = vmatprep.mubr.f32.mxu0 0.0
    %268 = vmatmul.mubr.f32.gmra.mrb[0].mxu0 %v108
    %v269 = vpop.f32.mrb[0].mxu0
    %v270 = vadd.f32 0.0, %v269
    %v271 = vpop.f32.mrb[0].mxu0
    %272 = vmatprep.mubr.f32.mxu0 0.0
    %273 = vmatmul.mubr.f32.gmra.mrb[0].mxu0 %v111
    %v274 = vpop.f32.mrb[0].mxu0
    %v275 = vadd.f32 0.0, %v274
    %v276 = vpop.f32.mrb[0].mxu0
    %277 = vdwg.mxu0
    %v278 = vld [vmem:[%s2] sm:$0xff]
    %v279 = vld [vmem:[%s2 + $0x8] sm:$0xff]
    %v280 = vld [vmem:[%s2 + $0x10] sm:$0x3]
    %v281 = vld [vmem:[%s2 + $0x18] sm:$0x3]
    %v282 = vmul.f32 %v180, %v30
    %v283 = vmul.f32 %v185, %v31
    %v284 = vmul.f32 %v190, %v30
    %v285 = vmul.f32 %v195, %v31
    %v286 = vmul.f32 %v200, %v30
    %v287 = vmul.f32 %v205, %v31
    %v288 = vmul.f32 %v210, %v30
    %v289 = vmul.f32 %v215, %v31
    %v290 = vmul.f32 %v220, %v30
    %v291 = vmul.f32 %v225, %v31
    %v292 = vmul.f32 %v230, %v30
    %v293 = vmul.f32 %v235, %v31
    %v294 = vmul.f32 %v240, %v30
    %v295 = vmul.f32 %v245, %v31
    %v296 = vmul.f32 %v250, %v30
    %v297 = vmul.f32 %v255, %v31
    %v298 = vmul.f32 %v260, %v30
    %v299 = vmul.f32 %v265, %v31
    %v300 = vmul.f32 %v270, %v30
    %v301 = vmul.f32 %v275, %v31
    %vm302 = vcmask 261120
    %v304 = vsel %vm302, %v279, 0
    %v307 = vsel %vm302, %v281, 0
    %309 = vmatprep.subr.mxu0 0.0
    %310 = vmatpush1.msra.mxu0 %v282
    %311 = vmatprep.subr.mxu0 0.0
    %312 = vmatpush1.msra.mxu0 %v283
    %313 = vmatprep.subr.mxu0 0.0
    %314 = vmatpush1.msra.mxu0 %v284
    %315 = vmatprep.subr.mxu0 0.0
    %316 = vmatpush1.msra.mxu0 %v285
    %317 = vmatprep.subr.mxu0 0.0
    %318 = vmatpush1.msra.mxu0 %v286
    %319 = vmatprep.subr.mxu0 0.0
    %320 = vmatpush1.msra.mxu0 %v287
    %321 = vmatprep.subr.mxu0 0.0
    %322 = vmatpush1.msra.mxu0 %v288
    %323 = vmatprep.subr.mxu0 0.0
    %324 = vmatpush1.msra.mxu0 %v289
    %325 = vmatprep.subr.mxu0 0.0
    %326 = vmatpush1.msra.mxu0 %v290
    %327 = vmatprep.subr.mxu0 0.0
    %328 = vmatpush1.msra.mxu0 %v291
    %329 = vmatprep.subr.mxu0 0.0
    %330 = vmatpush1.msra.mxu0 %v292
    %331 = vmatprep.subr.mxu0 0.0
    %332 = vmatpush1.msra.mxu0 %v293
    %333 = vmatprep.subr.mxu0 0.0
    %334 = vmatpush1.msra.mxu0 %v294
    %335 = vmatprep.subr.mxu0 0.0
    %336 = vmatpush1.msra.mxu0 %v295
    %337 = vmatprep.subr.mxu0 0.0
    %338 = vmatpush1.msra.mxu0 %v296
    %339 = vmatprep.subr.mxu0 0.0
    %340 = vmatpush1.msra.mxu0 %v297
    %341 = vmatprep.subr.mxu0 0.0
    %342 = vmatpush1.msra.mxu0 %v298
    %343 = vmatprep.subr.mxu0 0.0
    %344 = vmatpush1.msra.mxu0 %v299
    %345 = vmatprep.subr.mxu0 0.0
    %346 = vmatpush1.msra.mxu0 %v300
    %347 = vmatprep.subr.mxu0 0.0
    %348 = vmatpush1.msra.mxu0 %v301
    %349 = vmatprep.subr.mxu0 0.0
    %350 = vmatpush1.msra.mxu0 0.0
    %351 = vmatprep.subr.mxu0 0.0
    %352 = vmatpush1.msra.mxu0 0.0
    %353 = vmatprep.subr.mxu0 0.0
    %354 = vmatpush1.msra.mxu0 0.0
    %355 = vmatprep.subr.mxu0 0.0
    %356 = vmatpush1.msra.mxu0 0.0
    %357 = vmatprep.subr.mxu0 0.0
    %358 = vmatpush1.msra.mxu0 0.0
    %359 = vmatprep.subr.mxu0 0.0
    %360 = vmatpush1.msra.mxu0 0.0
    %361 = vmatprep.subr.mxu0 0.0
    %362 = vmatpush1.msra.mxu0 0.0
    %363 = vmatprep.subr.mxu0 0.0
    %364 = vmatpush1.msra.mxu0 0.0
    %365 = vmatprep.subr.mxu0 0.0
    %366 = vmatpush1.msra.mxu0 0.0
    %367 = vmatprep.subr.mxu0 0.0
    %368 = vmatpush1.msra.mxu0 0.0
    %369 = vmatprep.subr.mxu0 0.0
    %370 = vmatpush1.msra.mxu0 0.0
    %371 = vmatprep.subr.mxu0 0.0
    %372 = vmatpush1.msra.mxu0 0.0
    %373 = vmatprep.mubr.f32.mxu0 %v304
    %374 = vmatmul.mubr.f32.gmra.mrb[0].mxu0 %v278
    %v375 = vpop.f32.mrb[0].mxu0
    %v376 = vadd.f32 0.0, %v375
    %v377 = vpop.f32.mrb[0].mxu0
    %378 = vmatprep.mubr.f32.mxu0 %v307
    %379 = vmatmul.mubr.f32.gmra.mrb[0].mxu0 %v280
    %v380 = vpop.f32.mrb[0].mxu0
    %v381 = vadd.f32 0.0, %v380
    %v382 = vpop.f32.mrb[0].mxu0
    %383 = vdwg.mxu0
    %384 = vst [vmem:[#allocation2] sm:$0xff] %v376
    %385 = vst [vmem:[#allocation2 + $0x8] sm:$0x3] %v381
    // Predicated region
    $region14: #{tpu_custom_call.1} parent=1 // pred_check
      _
    $region15: #{tpu_custom_call.1} parent=1 // pred_check_branch
      %387 = sbr.rel (0) target = $region17
    $region16: #{tpu_custom_call.1} parent=1 // pred_region
      %s389 = ssub.s32 256, 256
      %390 = vsyncadd [#allocation3], %s389
      %s391 = sshll.u32 [#allocation2], 4
      %s392 = int_to_ptr.vmem [resolvable:$true] %s391
      %397 = dma.vmem_to_hbm [thread:$0]  %s392, 256, %s3, [#allocation3], 128, 128, 8
    $region17: #{tpu_custom_call.1} parent=1 // pred_fallthru
      _
    // Predicated region
    $region18: #{tpu_custom_call.1} parent=1 // pred_check
      _
    $region19: #{tpu_custom_call.1} parent=1 // pred_check_branch
      %399 = sbr.rel (0) target = $region21
    $region20: #{tpu_custom_call.1} parent=1 // pred_region
      %400 = dma.done [#allocation3], 256
    $region21: #{tpu_custom_call.1} parent=1 // pred_fallthru
      _
    %401 = vsyncpa [#allocation3], 1

</llo_original>
